<compile_context>
chip_gen: v5e
topology: v5e:2x2
jax: 0.10.0
libtpu: 0.0.40
codegen_flags: <defaults>
</compile_context>

<pallas_src>
import functools

import jax
import jax.numpy as jnp
import numpy as np
from jax.experimental import pallas as pl
from jax.experimental.pallas import tpu as pltpu


def _stack_kernel(x_ref, w3_ref, w1_ref, o_ref, *, H):
    """Fused residual stack, batch folded into rows (lane-dense layout).

    x_ref : (M, W*C) f32     M = N*H, all images stacked along the sublane axis
    w3_ref: (L, 3, W*C, W*R) bf16  block-banded 3x3-conv weights (one per dy)
    w1_ref: (L, W*R, W*C)    bf16  block-diagonal 1x1-conv weights
    o_ref : (M, W*C) f32
    """
    M, WC = x_ref.shape
    L = w3_ref.shape[0]

    x = x_ref[...].astype(jnp.float32)          # stays resident across layers

    # Per-image H-boundary masks: row r is row (r % H) of image (r // H).
    row = jax.lax.broadcasted_iota(jnp.int32, (M, WC), 0)
    top = (row % H) == 0            # first row of each image (no row above)
    bot = (row % H) == (H - 1)      # last  row of each image (no row below)

    for l in range(L):              # static unroll (L is small)
        a = jnp.maximum(x, 0.0)                                      # ReLU pre conv3
        # "SAME" padding along H == row shift via XLU roll + zeroed wrap rows.
        a_dn = jnp.where(top, 0.0, pltpu.roll(a, shift=1, axis=0))      # a[h-1]
        a_up = jnp.where(bot, 0.0, pltpu.roll(a, shift=M - 1, axis=0))  # a[h+1]
        # 3x3 conv == 3 banded matmuls; dx taps + W padding live in the K dim.
        acc = jnp.dot(a_dn.astype(jnp.bfloat16), w3_ref[l, 0],
                      preferred_element_type=jnp.float32)
        acc = acc + jnp.dot(a.astype(jnp.bfloat16), w3_ref[l, 1],
                            preferred_element_type=jnp.float32)
        acc = acc + jnp.dot(a_up.astype(jnp.bfloat16), w3_ref[l, 2],
                            preferred_element_type=jnp.float32)
        b = jnp.maximum(acc, 0.0).astype(jnp.bfloat16)               # ReLU pre conv1
        c = jnp.dot(b, w1_ref[l], preferred_element_type=jnp.float32)
        x = jnp.maximum(x + c, 0.0)                                  # residual + ReLU

    o_ref[...] = x.astype(o_ref.dtype)


def build_banded_weights(params, W, dtype=jnp.bfloat16):
    """ONE-TIME, host-side (numpy) weight prep — hoisted out of the hot path.

    Folds the spatial W axis (and its zero padding) into the conv weights:
      w3 (3,3,C,R) HWIO -> (3, W*C, W*R) block-banded matrices (one per dy) with
        [dy, w_in*C + c, w_out*R + r] = w3[dy, w_in - w_out + 1, c, r], |w_in-w_out|<=1
      w1 (R,C)          -> (W*R, W*C)   block-diagonal matrix
    Stacked over layers and cast to bf16 (accumulation stays f32 in-kernel).
    """
    w_in = np.arange(W)[:, None]
    w_out = np.arange(W)[None, :]
    dx = w_in - w_out + 1                                    # (W, W)
    valid = ((dx >= 0) & (dx <= 2)).astype(np.float32)
    dx_c = np.clip(dx, 0, 2)
    eye_w = np.eye(W, dtype=np.float32)

    w3_bands, w1_blks = [], []
    for w3, w1 in params:
        w3np = np.asarray(w3, dtype=np.float32)              # (3, 3, C, R) HWIO
        w1np = np.asarray(w1, dtype=np.float32)              # (R, C)
        C, R = w3np.shape[2], w3np.shape[3]
        bands = []
        for dy in range(3):
            blocks = w3np[dy][dx_c] * valid[:, :, None, None]       # (W, W, C, R)
            bands.append(blocks.transpose(0, 2, 1, 3).reshape(W * C, W * R))
        w3_bands.append(np.stack(bands))                            # (3, W*C, W*R)
        w1_blks.append(np.einsum("wv,rc->wrvc", eye_w, w1np).reshape(W * R, W * C))

    w3_bands = jnp.asarray(np.stack(w3_bands)).astype(dtype)  # (L, 3, W*C, W*R)
    w1_blks = jnp.asarray(np.stack(w1_blks)).astype(dtype)    # (L, W*R, W*C)
    return w3_bands, w1_blks


@jax.jit
def residual_stack(x_nhwc, w3_bands, w1_blks):
    """Apply the fused ResidualStack.  x_nhwc: (N,H,W,C); weights pre-banded bf16."""
    N, H, W, C = x_nhwc.shape
    M, WC = N * H, W * C
    x2d = x_nhwc.reshape(M, WC)      # lane-dense (W*C == 128 here), M multiple of 8

    out = pl.pallas_call(
        functools.partial(_stack_kernel, H=H),
        out_shape=jax.ShapeDtypeStruct((M, WC), x_nhwc.dtype),
        # No grid: single invocation, everything resident in VMEM (~0.6 MiB total).
        in_specs=[
            pl.BlockSpec(memory_space=pltpu.MemorySpace.VMEM),
            pl.BlockSpec(memory_space=pltpu.MemorySpace.VMEM),
            pl.BlockSpec(memory_space=pltpu.MemorySpace.VMEM),
        ],
        out_specs=pl.BlockSpec(memory_space=pltpu.MemorySpace.VMEM),
    )(x2d, w3_bands, w1_blks)
    return out.reshape(N, H, W, C)


def init_params(key, in_dim, h_dim, res_h_dim, n_res_layers):
    """Deterministic synthetic weights (shapes follow the nn.Module __init__).

    Conv3x3: PyTorch weight (res_h_dim, in_dim, 3, 3) -> here HWIO (3,3,in,res).
    Conv1x1: PyTorch weight (h_dim, res_h_dim, 1, 1) -> here (res, h_dim).
    Residual add requires in_dim == h_dim (as in the PyTorch usage).
    """
    assert in_dim == h_dim, "residual add requires in_dim == h_dim"
    params = []
    for _ in range(n_res_layers):
        k3, k1, key = jax.random.split(key, 3)
        w3 = 0.2 * jax.random.normal(k3, (3, 3, in_dim, res_h_dim), jnp.float32)
        w1 = 0.2 * jax.random.normal(k1, (res_h_dim, h_dim), jnp.float32)
        params.append((w3, w1))
    return params


def _reference_stack(x_nhwc, params):
    """Pure-JAX (f32) reference for verification."""
    for w3, w1 in params:
        a = jax.nn.relu(x_nhwc)
        y = jax.lax.conv_general_dilated(
            a, w3, window_strides=(1, 1), padding="SAME",
            dimension_numbers=("NHWC", "HWIO", "NHWC"))
        y = jax.nn.relu(y)
        z = jnp.einsum("nhwr,rc->nhwc", y, w1)
        x_nhwc = jax.nn.relu(x_nhwc + z)
    return x_nhwc


if __name__ == "__main__":
    # Small shapes consistent with the module:
    # batch=2, in_dim=h_dim=8 channels, res_h_dim=16, spatial 16x16, 2 layers.
    # (W*C = 128 -> lane-dense; N*H = 32 -> full-sublane matmul M.)
    N, C, H, W = 2, 8, 16, 16
    RES_H, N_LAYERS = 16, 2

    key = jax.random.PRNGKey(0)
    kx, kp = jax.random.split(key)

    x_nchw = jax.random.normal(kx, (N, C, H, W), jnp.float32)   # PyTorch NCHW
    params = init_params(kp, C, C, RES_H, N_LAYERS)

    # Init-time weight prep (banding + bf16 cast) — NOT in the per-call path.
    w3_bands, w1_blks = build_banded_weights(params, W)

    # NCHW -> NHWC so the channel dim maps onto the lane axis.
    x_nhwc = jnp.transpose(x_nchw, (0, 2, 3, 1))

    out_nhwc = jax.block_until_ready(residual_stack(x_nhwc, w3_bands, w1_blks))
    out_nchw = jnp.transpose(out_nhwc, (0, 3, 1, 2))            # back to NCHW

    ref_nhwc = jax.block_until_ready(_reference_stack(x_nhwc, params))

    assert out_nchw.shape == (N, C, H, W)
    # bf16 matmul operands (f32 accumulation) vs. an all-f32 reference.
    assert jnp.allclose(out_nhwc, ref_nhwc, atol=4e-2, rtol=4e-2), (
        "mismatch vs reference")

    print("KERNEL_OK")
</pallas_src>

<mosaic_0001>
module attributes {stable_mosaic.version = 11 : i64} {
  func.func @_stack_kernel(%arg0: memref<32x128xf32, #tpu.memory_space<vmem>>, %arg1: memref<2x3x128x256xbf16, #tpu.memory_space<vmem>>, %arg2: memref<2x256x128xbf16, #tpu.memory_space<vmem>>, %arg3: memref<32x128xf32, #tpu.memory_space<vmem>>) attributes {dimension_semantics = [], scalar_prefetch = 0 : i64, scratch_operands = 0 : i64, tpu.core_type = #tpu.core_type<tc>} {
    %c0 = arith.constant 0 : index
    %c0_0 = arith.constant 0 : index
    %0 = vector.load %arg0[%c0, %c0_0] : memref<32x128xf32, #tpu.memory_space<vmem>>, vector<32x128xf32>
    %1 = tpu.iota {dimensions = array<i32: 0>} : vector<32x128xi32>
    %c16_i32 = arith.constant 16 : i32
    %c0_i32 = arith.constant 0 : i32
    %2 = arith.cmpi eq, %c16_i32, %c0_i32 : i32
    %c1_i32 = arith.constant 1 : i32
    %3 = arith.select %2, %c1_i32, %c16_i32 : i32
    %4 = vector.broadcast %3 : i32 to vector<32x128xi32>
    %5 = arith.remsi %1, %4 : vector<32x128xi32>
    %c0_i32_1 = arith.constant 0 : i32
    %6 = vector.broadcast %c0_i32_1 : i32 to vector<32x128xi32>
    %7 = arith.cmpi ne, %5, %6 : vector<32x128xi32>
    %c0_i32_2 = arith.constant 0 : i32
    %8 = vector.broadcast %c0_i32_2 : i32 to vector<32x128xi32>
    %9 = arith.cmpi slt, %5, %8 : vector<32x128xi32>
    %c0_i32_3 = arith.constant 0 : i32
    %10 = arith.cmpi slt, %3, %c0_i32_3 : i32
    %11 = vector.broadcast %10 : i1 to vector<32x128xi1>
    %12 = vector.broadcast %11 : vector<32x128xi1> to vector<32x128xi1>
    %13 = arith.xori %9, %12 : vector<32x128xi1>
    %14 = arith.andi %13, %7 : vector<32x128xi1>
    %15 = vector.broadcast %3 : i32 to vector<32x128xi32>
    %16 = arith.addi %5, %15 : vector<32x128xi32>
    %17 = arith.select %14, %16, %5 : vector<32x128xi1>, vector<32x128xi32>
    %c0_i32_4 = arith.constant 0 : i32
    %18 = vector.broadcast %c0_i32_4 : i32 to vector<32x128xi32>
    %19 = arith.cmpi eq, %17, %18 : vector<32x128xi32>
    %c16_i32_5 = arith.constant 16 : i32
    %c0_i32_6 = arith.constant 0 : i32
    %20 = arith.cmpi eq, %c16_i32_5, %c0_i32_6 : i32
    %c1_i32_7 = arith.constant 1 : i32
    %21 = arith.select %20, %c1_i32_7, %c16_i32_5 : i32
    %22 = vector.broadcast %21 : i32 to vector<32x128xi32>
    %23 = arith.remsi %1, %22 : vector<32x128xi32>
    %c0_i32_8 = arith.constant 0 : i32
    %24 = vector.broadcast %c0_i32_8 : i32 to vector<32x128xi32>
    %25 = arith.cmpi ne, %23, %24 : vector<32x128xi32>
    %c0_i32_9 = arith.constant 0 : i32
    %26 = vector.broadcast %c0_i32_9 : i32 to vector<32x128xi32>
    %27 = arith.cmpi slt, %23, %26 : vector<32x128xi32>
    %c0_i32_10 = arith.constant 0 : i32
    %28 = arith.cmpi slt, %21, %c0_i32_10 : i32
    %29 = vector.broadcast %28 : i1 to vector<32x128xi1>
    %30 = vector.broadcast %29 : vector<32x128xi1> to vector<32x128xi1>
    %31 = arith.xori %27, %30 : vector<32x128xi1>
    %32 = arith.andi %31, %25 : vector<32x128xi1>
    %33 = vector.broadcast %21 : i32 to vector<32x128xi32>
    %34 = arith.addi %23, %33 : vector<32x128xi32>
    %35 = arith.select %32, %34, %23 : vector<32x128xi1>, vector<32x128xi32>
    %c15_i32 = arith.constant 15 : i32
    %36 = vector.broadcast %c15_i32 : i32 to vector<32x128xi32>
    %37 = arith.cmpi eq, %35, %36 : vector<32x128xi32>
    %cst = arith.constant 0.000000e+00 : f32
    %38 = vector.broadcast %cst : f32 to vector<32x128xf32>
    %39 = arith.maximumf %0, %38 : vector<32x128xf32>
    %c1_i32_11 = arith.constant 1 : i32
    %40 = tpu.dynamic_rotate %39 by %c1_i32_11 dim 0 : vector<32x128xf32>, i32 -> vector<32x128xf32>
    %cst_12 = arith.constant 0.000000e+00 : f32
    %41 = vector.broadcast %cst_12 : f32 to vector<32x128xf32>
    %42 = arith.select %19, %41, %40 : vector<32x128xi1>, vector<32x128xf32>
    %c31_i32 = arith.constant 31 : i32
    %43 = tpu.dynamic_rotate %39 by %c31_i32 dim 0 : vector<32x128xf32>, i32 -> vector<32x128xf32>
    %cst_13 = arith.constant 0.000000e+00 : f32
    %44 = vector.broadcast %cst_13 : f32 to vector<32x128xf32>
    %45 = arith.select %37, %44, %43 : vector<32x128xi1>, vector<32x128xf32>
    %46 = arith.truncf %42 : vector<32x128xf32> to vector<32x128xbf16>
    %c0_14 = arith.constant 0 : index
    %c0_15 = arith.constant 0 : index
    %c0_16 = arith.constant 0 : index
    %c0_17 = arith.constant 0 : index
    %47 = vector.load %arg1[%c0_14, %c0_15, %c0_16, %c0_17] : memref<2x3x128x256xbf16, #tpu.memory_space<vmem>>, vector<1x1x128x256xbf16>
    %48 = vector.shape_cast %47 : vector<1x1x128x256xbf16> to vector<128x256xbf16>
    %cst_18 = arith.constant dense<0.000000e+00> : vector<32x256xf32>
    %49 = tpu.matmul %46, %48, %cst_18 {dimension_numbers = #tpu.dot_dimension_numbers<[1], [0], [0], [1], [0, 0, 1, 1], [], []>} : vector<32x128xbf16>, vector<128x256xbf16>, vector<32x256xf32> -> vector<32x256xf32>
    %50 = arith.truncf %39 : vector<32x128xf32> to vector<32x128xbf16>
    %c0_19 = arith.constant 0 : index
    %c1 = arith.constant 1 : index
    %c0_20 = arith.constant 0 : index
    %c0_21 = arith.constant 0 : index
    %51 = vector.load %arg1[%c0_19, %c1, %c0_20, %c0_21] : memref<2x3x128x256xbf16, #tpu.memory_space<vmem>>, vector<1x1x128x256xbf16>
    %52 = vector.shape_cast %51 : vector<1x1x128x256xbf16> to vector<128x256xbf16>
    %cst_22 = arith.constant dense<0.000000e+00> : vector<32x256xf32>
    %53 = tpu.matmul %50, %52, %cst_22 {dimension_numbers = #tpu.dot_dimension_numbers<[1], [0], [0], [1], [0, 0, 1, 1], [], []>} : vector<32x128xbf16>, vector<128x256xbf16>, vector<32x256xf32> -> vector<32x256xf32>
    %54 = arith.addf %49, %53 : vector<32x256xf32>
    %55 = arith.truncf %45 : vector<32x128xf32> to vector<32x128xbf16>
    %c0_23 = arith.constant 0 : index
    %c2 = arith.constant 2 : index
    %c0_24 = arith.constant 0 : index
    %c0_25 = arith.constant 0 : index
    %56 = vector.load %arg1[%c0_23, %c2, %c0_24, %c0_25] : memref<2x3x128x256xbf16, #tpu.memory_space<vmem>>, vector<1x1x128x256xbf16>
    %57 = vector.shape_cast %56 : vector<1x1x128x256xbf16> to vector<128x256xbf16>
    %cst_26 = arith.constant dense<0.000000e+00> : vector<32x256xf32>
    %58 = tpu.matmul %55, %57, %cst_26 {dimension_numbers = #tpu.dot_dimension_numbers<[1], [0], [0], [1], [0, 0, 1, 1], [], []>} : vector<32x128xbf16>, vector<128x256xbf16>, vector<32x256xf32> -> vector<32x256xf32>
    %59 = arith.addf %54, %58 : vector<32x256xf32>
    %cst_27 = arith.constant 0.000000e+00 : f32
    %60 = vector.broadcast %cst_27 : f32 to vector<32x256xf32>
    %61 = arith.maximumf %59, %60 : vector<32x256xf32>
    %62 = arith.truncf %61 : vector<32x256xf32> to vector<32x256xbf16>
    %c0_28 = arith.constant 0 : index
    %c0_29 = arith.constant 0 : index
    %c0_30 = arith.constant 0 : index
    %63 = vector.load %arg2[%c0_28, %c0_29, %c0_30] : memref<2x256x128xbf16, #tpu.memory_space<vmem>>, vector<1x256x128xbf16>
    %64 = vector.shape_cast %63 : vector<1x256x128xbf16> to vector<256x128xbf16>
    %cst_31 = arith.constant dense<0.000000e+00> : vector<32x128xf32>
    %65 = tpu.matmul %62, %64, %cst_31 {dimension_numbers = #tpu.dot_dimension_numbers<[1], [0], [0], [1], [0, 0, 1, 1], [], []>} : vector<32x256xbf16>, vector<256x128xbf16>, vector<32x128xf32> -> vector<32x128xf32>
    %66 = arith.addf %0, %65 : vector<32x128xf32>
    %cst_32 = arith.constant 0.000000e+00 : f32
    %67 = vector.broadcast %cst_32 : f32 to vector<32x128xf32>
    %68 = arith.maximumf %66, %67 : vector<32x128xf32>
    %cst_33 = arith.constant 0.000000e+00 : f32
    %69 = vector.broadcast %cst_33 : f32 to vector<32x128xf32>
    %70 = arith.maximumf %68, %69 : vector<32x128xf32>
    %c1_i32_34 = arith.constant 1 : i32
    %71 = tpu.dynamic_rotate %70 by %c1_i32_34 dim 0 : vector<32x128xf32>, i32 -> vector<32x128xf32>
    %cst_35 = arith.constant 0.000000e+00 : f32
    %72 = vector.broadcast %cst_35 : f32 to vector<32x128xf32>
    %73 = arith.select %19, %72, %71 : vector<32x128xi1>, vector<32x128xf32>
    %c31_i32_36 = arith.constant 31 : i32
    %74 = tpu.dynamic_rotate %70 by %c31_i32_36 dim 0 : vector<32x128xf32>, i32 -> vector<32x128xf32>
    %cst_37 = arith.constant 0.000000e+00 : f32
    %75 = vector.broadcast %cst_37 : f32 to vector<32x128xf32>
    %76 = arith.select %37, %75, %74 : vector<32x128xi1>, vector<32x128xf32>
    %77 = arith.truncf %73 : vector<32x128xf32> to vector<32x128xbf16>
    %c1_38 = arith.constant 1 : index
    %c0_39 = arith.constant 0 : index
    %c0_40 = arith.constant 0 : index
    %c0_41 = arith.constant 0 : index
    %78 = vector.load %arg1[%c1_38, %c0_39, %c0_40, %c0_41] : memref<2x3x128x256xbf16, #tpu.memory_space<vmem>>, vector<1x1x128x256xbf16>
    %79 = vector.shape_cast %78 : vector<1x1x128x256xbf16> to vector<128x256xbf16>
    %cst_42 = arith.constant dense<0.000000e+00> : vector<32x256xf32>
    %80 = tpu.matmul %77, %79, %cst_42 {dimension_numbers = #tpu.dot_dimension_numbers<[1], [0], [0], [1], [0, 0, 1, 1], [], []>} : vector<32x128xbf16>, vector<128x256xbf16>, vector<32x256xf32> -> vector<32x256xf32>
    %81 = arith.truncf %70 : vector<32x128xf32> to vector<32x128xbf16>
    %c1_43 = arith.constant 1 : index
    %c1_44 = arith.constant 1 : index
    %c0_45 = arith.constant 0 : index
    %c0_46 = arith.constant 0 : index
    %82 = vector.load %arg1[%c1_43, %c1_44, %c0_45, %c0_46] : memref<2x3x128x256xbf16, #tpu.memory_space<vmem>>, vector<1x1x128x256xbf16>
    %83 = vector.shape_cast %82 : vector<1x1x128x256xbf16> to vector<128x256xbf16>
    %cst_47 = arith.constant dense<0.000000e+00> : vector<32x256xf32>
    %84 = tpu.matmul %81, %83, %cst_47 {dimension_numbers = #tpu.dot_dimension_numbers<[1], [0], [0], [1], [0, 0, 1, 1], [], []>} : vector<32x128xbf16>, vector<128x256xbf16>, vector<32x256xf32> -> vector<32x256xf32>
    %85 = arith.addf %80, %84 : vector<32x256xf32>
    %86 = arith.truncf %76 : vector<32x128xf32> to vector<32x128xbf16>
    %c1_48 = arith.constant 1 : index
    %c2_49 = arith.constant 2 : index
    %c0_50 = arith.constant 0 : index
    %c0_51 = arith.constant 0 : index
    %87 = vector.load %arg1[%c1_48, %c2_49, %c0_50, %c0_51] : memref<2x3x128x256xbf16, #tpu.memory_space<vmem>>, vector<1x1x128x256xbf16>
    %88 = vector.shape_cast %87 : vector<1x1x128x256xbf16> to vector<128x256xbf16>
    %cst_52 = arith.constant dense<0.000000e+00> : vector<32x256xf32>
    %89 = tpu.matmul %86, %88, %cst_52 {dimension_numbers = #tpu.dot_dimension_numbers<[1], [0], [0], [1], [0, 0, 1, 1], [], []>} : vector<32x128xbf16>, vector<128x256xbf16>, vector<32x256xf32> -> vector<32x256xf32>
    %90 = arith.addf %85, %89 : vector<32x256xf32>
    %cst_53 = arith.constant 0.000000e+00 : f32
    %91 = vector.broadcast %cst_53 : f32 to vector<32x256xf32>
    %92 = arith.maximumf %90, %91 : vector<32x256xf32>
    %93 = arith.truncf %92 : vector<32x256xf32> to vector<32x256xbf16>
    %c1_54 = arith.constant 1 : index
    %c0_55 = arith.constant 0 : index
    %c0_56 = arith.constant 0 : index
    %94 = vector.load %arg2[%c1_54, %c0_55, %c0_56] : memref<2x256x128xbf16, #tpu.memory_space<vmem>>, vector<1x256x128xbf16>
    %95 = vector.shape_cast %94 : vector<1x256x128xbf16> to vector<256x128xbf16>
    %cst_57 = arith.constant dense<0.000000e+00> : vector<32x128xf32>
    %96 = tpu.matmul %93, %95, %cst_57 {dimension_numbers = #tpu.dot_dimension_numbers<[1], [0], [0], [1], [0, 0, 1, 1], [], []>} : vector<32x256xbf16>, vector<256x128xbf16>, vector<32x128xf32> -> vector<32x128xf32>
    %97 = arith.addf %68, %96 : vector<32x128xf32>
    %cst_58 = arith.constant 0.000000e+00 : f32
    %98 = vector.broadcast %cst_58 : f32 to vector<32x128xf32>
    %99 = arith.maximumf %97, %98 : vector<32x128xf32>
    %c0_59 = arith.constant 0 : index
    %c0_60 = arith.constant 0 : index
    %100 = vector.load %arg3[%c0_59, %c0_60] : memref<32x128xf32, #tpu.memory_space<vmem>>, vector<32x128xf32>
    tpu.vector_store %arg3[%c0_59, %c0_60], %99 {strides = array<i32>} : memref<32x128xf32, #tpu.memory_space<vmem>>, vector<32x128xf32>,
    return
  }
}

</mosaic_0001>

<llo_original>
// kernel: residual_stack.1
$region0: #{residual_stack.1}
  #allocation0 [shape = 'u32[]', space=smem, size = 0x4, offset = 0x4, fixed_abs, tag = 'smem constant byte address 0x4 - core index']
  #allocation1 [shape = 'u32[72,128]{1,0:T(1,128)}', space=vmem, size = 0x9000, scoped, tag = 'internal scratch']
  %s0 = inlined_call_operand.vmem [shape: f32[32,128], index: 0, kind: input, shape index: {}]
  %s1 = inlined_call_operand.vmem [shape: bf16[2,3,128,256], index: 1, kind: input, shape index: {}]
  %s2 = inlined_call_operand.vmem [shape: bf16[2,256,128], index: 2, kind: input, shape index: {}]
  %s3 = inlined_call_operand.vmem [shape: f32[32,128], index: 3, kind: output, shape index: {}]
  %s4 = sld [smem:[#allocation0]]
  $region22: #{residual_stack.1} parent=0
    _
  %s6 = ssub.s32 1, %s4
  %s7 = scalar_select 0, %s6, %s4
  // Predicated region
  $region2: #{residual_stack.1} parent=0 // pred_check
    _
  $region3: #{residual_stack.1} parent=0 // pred_check_branch
    %9 = sbr.rel (0) target = $region5
  $region4: #{residual_stack.1} parent=0 // pred_region
    _
  $region5: #{residual_stack.1} parent=0 // pred_fallthru
    _
  // Predicated region
  $region6: #{residual_stack.1} parent=0 // pred_check
    _
  $region7: #{residual_stack.1} parent=0 // pred_check_branch
    %11 = sbr.rel (0) target = $region9
  $region8: #{residual_stack.1} parent=0 // pred_region
    _
  $region9: #{residual_stack.1} parent=0 // pred_fallthru
    _
  // Predicated region
  $region10: #{residual_stack.1} parent=0 // pred_check
    _
  $region11: #{residual_stack.1} parent=0 // pred_check_branch
    %13 = sbr.rel (0) target = $region13
  $region12: #{residual_stack.1} parent=0 // pred_region
    _
  $region13: #{residual_stack.1} parent=0 // pred_fallthru
    _
  %v14 = vld [vmem:[%s0] sm:$0xff]
  %v15 = vld [vmem:[%s0 + $0x8] sm:$0xff]
  %v16 = vld [vmem:[%s0 + $0x10] sm:$0xff]
  %v17 = vld [vmem:[%s0 + $0x18] sm:$0xff]
  %v18 = vlaneseq
  %v19 = vshrl.u32 %v18, 7
  %v20 = vadd.s32 %v19, 8
  %v21 = vadd.s32 %v19, 16
  %v22 = vadd.s32 %v19, 24
  %vm23 = vcmp.lt.s32.totalorder %v19, 0
  %v24 = vsub.s32 0, %v19
  %v25 = vsel %vm23, %v24, %v19
  %v26 = vshrl.u32 %v25, 4
  %v27 = vand.u32 %v25, 15
  %v28 = vsub.s32 0, %v27
  %v29 = vsel %vm23, %v28, %v27
  %vm30 = vcmp.lt.s32.totalorder %v20, 0
  %v31 = vsub.s32 0, %v20
  %v32 = vsel %vm30, %v31, %v20
  %v33 = vshrl.u32 %v32, 4
  %v34 = vand.u32 %v32, 15
  %v35 = vsub.s32 0, %v34
  %v36 = vsel %vm30, %v35, %v34
  %vm37 = vcmp.lt.s32.totalorder %v21, 0
  %v38 = vsub.s32 0, %v21
  %v39 = vsel %vm37, %v38, %v21
  %v40 = vshrl.u32 %v39, 4
  %v41 = vand.u32 %v39, 15
  %v42 = vsub.s32 0, %v41
  %v43 = vsel %vm37, %v42, %v41
  %vm44 = vcmp.lt.s32.totalorder %v22, 0
  %v45 = vsub.s32 0, %v22
  %v46 = vsel %vm44, %v45, %v22
  %v47 = vshrl.u32 %v46, 4
  %v48 = vand.u32 %v46, 15
  %v49 = vsub.s32 0, %v48
  %v50 = vsel %vm44, %v49, %v48
  %vm51 = vcmp.ne.s32.totalorder %v29, 0
  %vm52 = vcmp.ne.s32.totalorder %v36, 0
  %vm53 = vcmp.ne.s32.totalorder %v43, 0
  %vm54 = vcmp.ne.s32.totalorder %v50, 0
  %vm55 = vcmp.lt.s32.totalorder %v29, 0
  %vm56 = vcmp.lt.s32.totalorder %v36, 0
  %vm57 = vcmp.lt.s32.totalorder %v43, 0
  %vm58 = vcmp.lt.s32.totalorder %v50, 0
  %vm59 = vmand %vm55, %vm51
  %vm60 = vmand %vm56, %vm52
  %vm61 = vmand %vm57, %vm53
  %vm62 = vmand %vm58, %vm54
  %v63 = vadd.s32 %v29, 16
  %v64 = vadd.s32 %v36, 16
  %v65 = vadd.s32 %v43, 16
  %v66 = vadd.s32 %v50, 16
  %v67 = vsel %vm59, %v63, %v29
  %v68 = vsel %vm60, %v64, %v36
  %v69 = vsel %vm61, %v65, %v43
  %v70 = vsel %vm62, %v66, %v50
  %vm71 = vcmp.eq.s32.totalorder %v67, 0
  %vm72 = vcmp.eq.s32.totalorder %v68, 0
  %vm73 = vcmp.eq.s32.totalorder %v69, 0
  %vm74 = vcmp.eq.s32.totalorder %v70, 0
  %vm75 = vcmp.eq.s32.totalorder %v67, 15
  %vm76 = vcmp.eq.s32.totalorder %v68, 15
  %vm77 = vcmp.eq.s32.totalorder %v69, 15
  %vm78 = vcmp.eq.s32.totalorder %v70, 15
  %v79 = vmax.f32 %v14, 0.0
  %v80 = vmax.f32 %v15, 0.0
  %v81 = vmax.f32 %v16, 0.0
  %v82 = vmax.f32 %v17, 0.0
  %v83 = vrot.slane %v79, 7
  %v84 = vrot.slane %v80, 7
  %v85 = vrot.slane %v81, 7
  %v86 = vrot.slane %v82, 7
  %vm87 = vcmp.lt.s32.totalorder %v19, 1
  %v88 = vsel %vm87, %v85, %v86
  %v89 = vsel %vm87, %v84, %v85
  %v90 = vsel %vm87, %v83, %v84
  %v91 = vsel %vm87, %v86, %v83
  %v92 = vsel %vm71, 0.0, %v91
  %v93 = vsel %vm72, 0.0, %v90
  %v94 = vsel %vm73, 0.0, %v89
  %v95 = vsel %vm74, 0.0, %v88
  %v96 = vrot.slane %v79, 1
  %v97 = vrot.slane %v80, 1
  %v98 = vrot.slane %v81, 1
  %v99 = vrot.slane %v82, 1
  %vm100 = vcmp.lt.s32.totalorder %v19, 7
  %v101 = vsel %vm100, %v98, %v99
  %v102 = vsel %vm100, %v97, %v98
  %v103 = vsel %vm100, %v96, %v97
  %v104 = vsel %vm100, %v99, %v96
  %v105 = vsel %vm75, 0.0, %v103
  %v106 = vsel %vm76, 0.0, %v102
  %v107 = vsel %vm77, 0.0, %v101
  %v108 = vsel %vm78, 0.0, %v104
  %v109 = vpack.c.bf16 %v93, %v92
  %v110 = vpack.c.bf16 %v95, %v94
  %v111 = vld [vmem:[%s1] sm:$0xff]
  %v112 = vld [vmem:[%s1 + $0x8] sm:$0xff]
  %v113 = vld [vmem:[%s1 + $0x10] sm:$0xff]
  %v114 = vld [vmem:[%s1 + $0x18] sm:$0xff]
  %v115 = vld [vmem:[%s1 + $0x20] sm:$0xff]
  %v116 = vld [vmem:[%s1 + $0x28] sm:$0xff]
  %v117 = vld [vmem:[%s1 + $0x30] sm:$0xff]
  %v118 = vld [vmem:[%s1 + $0x38] sm:$0xff]
  %v119 = vld [vmem:[%s1 + $0x40] sm:$0xff]
  %v120 = vld [vmem:[%s1 + $0x48] sm:$0xff]
  %v121 = vld [vmem:[%s1 + $0x50] sm:$0xff]
  %v122 = vld [vmem:[%s1 + $0x58] sm:$0xff]
  %v123 = vld [vmem:[%s1 + $0x60] sm:$0xff]
  %v124 = vld [vmem:[%s1 + $0x68] sm:$0xff]
  %v125 = vld [vmem:[%s1 + $0x70] sm:$0xff]
  %v126 = vld [vmem:[%s1 + $0x78] sm:$0xff]
  %v127 = vpack.c.bf16 %v80, %v79
  %v128 = vpack.c.bf16 %v82, %v81
  %s129 = scalar_lea.vmem %s1, 128
  %v130 = vld [vmem:[%s129] sm:$0xff]
  %v131 = vld [vmem:[%s129 + $0x8] sm:$0xff]
  %v132 = vld [vmem:[%s129 + $0x10] sm:$0xff]
  %v133 = vld [vmem:[%s129 + $0x18] sm:$0xff]
  %v134 = vld [vmem:[%s129 + $0x20] sm:$0xff]
  %v135 = vld [vmem:[%s129 + $0x28] sm:$0xff]
  %v136 = vld [vmem:[%s129 + $0x30] sm:$0xff]
  %v137 = vld [vmem:[%s129 + $0x38] sm:$0xff]
  %v138 = vld [vmem:[%s129 + $0x40] sm:$0xff]
  %v139 = vld [vmem:[%s129 + $0x48] sm:$0xff]
  %v140 = vld [vmem:[%s129 + $0x50] sm:$0xff]
  %v141 = vld [vmem:[%s129 + $0x58] sm:$0xff]
  %v142 = vld [vmem:[%s129 + $0x60] sm:$0xff]
  %v143 = vld [vmem:[%s129 + $0x68] sm:$0xff]
  %v144 = vld [vmem:[%s129 + $0x70] sm:$0xff]
  %v145 = vld [vmem:[%s129 + $0x78] sm:$0xff]
  %v162 = vunpack.c.l.b16 %v130
  %v163 = vunpack.c.h.b16 %v130
  %v164 = vunpack.c.l.b16 %v131
  %v165 = vunpack.c.h.b16 %v131
  %v166 = vunpack.c.l.b16 %v132
  %v167 = vunpack.c.h.b16 %v132
  %v168 = vunpack.c.l.b16 %v133
  %v169 = vunpack.c.h.b16 %v133
  %v170 = vunpack.c.l.b16 %v134
  %v171 = vunpack.c.h.b16 %v134
  %v172 = vunpack.c.l.b16 %v135
  %v173 = vunpack.c.h.b16 %v135
  %v174 = vunpack.c.l.b16 %v136
  %v175 = vunpack.c.h.b16 %v136
  %v176 = vunpack.c.l.b16 %v137
  %v177 = vunpack.c.h.b16 %v137
  %v178 = vunpack.c.l.b16 %v138
  %v179 = vunpack.c.h.b16 %v138
  %v180 = vunpack.c.l.b16 %v139
  %v181 = vunpack.c.h.b16 %v139
  %v182 = vunpack.c.l.b16 %v140
  %v183 = vunpack.c.h.b16 %v140
  %v184 = vunpack.c.l.b16 %v141
  %v185 = vunpack.c.h.b16 %v141
  %v186 = vunpack.c.l.b16 %v142
  %v187 = vunpack.c.h.b16 %v142
  %v188 = vunpack.c.l.b16 %v143
  %v189 = vunpack.c.h.b16 %v143
  %v190 = vunpack.c.l.b16 %v144
  %v191 = vunpack.c.h.b16 %v144
  %v192 = vunpack.c.l.b16 %v145
  %v193 = vunpack.c.h.b16 %v145
  %v194 = vpack.c.b16 %v164, %v162
  %v195 = vpack.c.b16 %v165, %v163
  %v196 = vpack.c.b16 %v168, %v166
  %v197 = vpack.c.b16 %v169, %v167
  %v198 = vpack.c.b16 %v172, %v170
  %v199 = vpack.c.b16 %v173, %v171
  %v200 = vpack.c.b16 %v176, %v174
  %v201 = vpack.c.b16 %v177, %v175
  %v202 = vpack.c.b16 %v180, %v178
  %v203 = vpack.c.b16 %v181, %v179
  %v204 = vpack.c.b16 %v184, %v182
  %v205 = vpack.c.b16 %v185, %v183
  %v206 = vpack.c.b16 %v188, %v186
  %v207 = vpack.c.b16 %v189, %v187
  %v208 = vpack.c.b16 %v192, %v190
  %v209 = vpack.c.b16 %v193, %v191
  %226 = vmatpush.bf16.msra.mxu0 %v208
  %227 = vmatpush.bf16.msra.mxu0 %v206
  %228 = vmatpush.bf16.msra.mxu0 %v204
  %229 = vmatpush.bf16.msra.mxu0 %v202
  %230 = vmatpush.bf16.msra.mxu0 %v200
  %231 = vmatpush.bf16.msra.mxu0 %v198
  %232 = vmatpush.bf16.msra.mxu0 %v196
  %233 = vmatpush.bf16.msra.mxu0 %v194
  %234 = vmatmul.bf16.gmra.mxu0 %v127
  %v235 = vpop.f32.mrf.mxu0
  %v236 = vadd.f32 0.0, %v235
  %v237 = vpop.f32.mrf.mxu0
  %v238 = vadd.f32 0.0, %v237
  %239 = vmatmul.bf16.gmra.mxu0 %v128
  %v240 = vpop.f32.mrf.mxu0
  %v241 = vadd.f32 0.0, %v240
  %v242 = vpop.f32.mrf.mxu0
  %v243 = vadd.f32 0.0, %v242
  %244 = vdwg.mxu0
  %245 = vmatpush.bf16.msra.mxu0 %v209
  %246 = vmatpush.bf16.msra.mxu0 %v207
  %247 = vmatpush.bf16.msra.mxu0 %v205
  %248 = vmatpush.bf16.msra.mxu0 %v203
  %249 = vmatpush.bf16.msra.mxu0 %v201
  %250 = vmatpush.bf16.msra.mxu0 %v199
  %251 = vmatpush.bf16.msra.mxu0 %v197
  %252 = vmatpush.bf16.msra.mxu0 %v195
  %253 = vmatmul.bf16.gmra.mxu0 %v127
  %v254 = vpop.f32.mrf.mxu0
  %v255 = vadd.f32 0.0, %v254
  %v256 = vpop.f32.mrf.mxu0
  %v257 = vadd.f32 0.0, %v256
  %258 = vmatmul.bf16.gmra.mxu0 %v128
  %v259 = vpop.f32.mrf.mxu0
  %v260 = vadd.f32 0.0, %v259
  %v261 = vpop.f32.mrf.mxu0
  %v262 = vadd.f32 0.0, %v261
  %263 = vdwg.mxu0
  %v280 = vunpack.c.l.b16 %v111
  %v281 = vunpack.c.h.b16 %v111
  %v282 = vunpack.c.l.b16 %v112
  %v283 = vunpack.c.h.b16 %v112
  %v284 = vunpack.c.l.b16 %v113
  %v285 = vunpack.c.h.b16 %v113
  %v286 = vunpack.c.l.b16 %v114
  %v287 = vunpack.c.h.b16 %v114
  %v288 = vunpack.c.l.b16 %v115
  %v289 = vunpack.c.h.b16 %v115
  %v290 = vunpack.c.l.b16 %v116
  %v291 = vunpack.c.h.b16 %v116
  %v292 = vunpack.c.l.b16 %v117
  %v293 = vunpack.c.h.b16 %v117
  %v294 = vunpack.c.l.b16 %v118
  %v295 = vunpack.c.h.b16 %v118
  %v296 = vunpack.c.l.b16 %v119
  %v297 = vunpack.c.h.b16 %v119
  %v298 = vunpack.c.l.b16 %v120
  %v299 = vunpack.c.h.b16 %v120
  %v300 = vunpack.c.l.b16 %v121
  %v301 = vunpack.c.h.b16 %v121
  %v302 = vunpack.c.l.b16 %v122
  %v303 = vunpack.c.h.b16 %v122
  %v304 = vunpack.c.l.b16 %v123
  %v305 = vunpack.c.h.b16 %v123
  %v306 = vunpack.c.l.b16 %v124
  %v307 = vunpack.c.h.b16 %v124
  %v308 = vunpack.c.l.b16 %v125
  %v309 = vunpack.c.h.b16 %v125
  %v310 = vunpack.c.l.b16 %v126
  %v311 = vunpack.c.h.b16 %v126
  %v312 = vpack.c.b16 %v282, %v280
  %v313 = vpack.c.b16 %v283, %v281
  %v314 = vpack.c.b16 %v286, %v284
  %v315 = vpack.c.b16 %v287, %v285
  %v316 = vpack.c.b16 %v290, %v288
  %v317 = vpack.c.b16 %v291, %v289
  %v318 = vpack.c.b16 %v294, %v292
  %v319 = vpack.c.b16 %v295, %v293
  %v320 = vpack.c.b16 %v298, %v296
  %v321 = vpack.c.b16 %v299, %v297
  %v322 = vpack.c.b16 %v302, %v300
  %v323 = vpack.c.b16 %v303, %v301
  %v324 = vpack.c.b16 %v306, %v304
  %v325 = vpack.c.b16 %v307, %v305
  %v326 = vpack.c.b16 %v310, %v308
  %v327 = vpack.c.b16 %v311, %v309
  %344 = vmatpush.bf16.msra.mxu0 %v326
  %345 = vmatpush.bf16.msra.mxu0 %v324
  %346 = vmatpush.bf16.msra.mxu0 %v322
  %347 = vmatpush.bf16.msra.mxu0 %v320
  %348 = vmatpush.bf16.msra.mxu0 %v318
  %349 = vmatpush.bf16.msra.mxu0 %v316
  %350 = vmatpush.bf16.msra.mxu0 %v314
  %351 = vmatpush.bf16.msra.mxu0 %v312
  %352 = vmatmul.bf16.gmra.mxu0 %v109
  %v353 = vpop.f32.mrf.mxu0
  %v354 = vadd.f32 %v236, %v353
  %v355 = vpop.f32.mrf.mxu0
  %v356 = vadd.f32 %v238, %v355
  %357 = vmatmul.bf16.gmra.mxu0 %v110
  %v358 = vpop.f32.mrf.mxu0
  %v359 = vadd.f32 %v241, %v358
  %v360 = vpop.f32.mrf.mxu0
  %v361 = vadd.f32 %v243, %v360
  %362 = vdwg.mxu0
  %363 = vmatpush.bf16.msra.mxu0 %v327
  %364 = vmatpush.bf16.msra.mxu0 %v325
  %365 = vmatpush.bf16.msra.mxu0 %v323
  %366 = vmatpush.bf16.msra.mxu0 %v321
  %367 = vmatpush.bf16.msra.mxu0 %v319
  %368 = vmatpush.bf16.msra.mxu0 %v317
  %369 = vmatpush.bf16.msra.mxu0 %v315
  %370 = vmatpush.bf16.msra.mxu0 %v313
  %371 = vmatmul.bf16.gmra.mxu0 %v109
  %v372 = vpop.f32.mrf.mxu0
  %v373 = vadd.f32 %v255, %v372
  %v374 = vpop.f32.mrf.mxu0
  %v375 = vadd.f32 %v257, %v374
  %376 = vmatmul.bf16.gmra.mxu0 %v110
  %v377 = vpop.f32.mrf.mxu0
  %v378 = vadd.f32 %v260, %v377
  %v379 = vpop.f32.mrf.mxu0
  %v380 = vadd.f32 %v262, %v379
  %381 = vdwg.mxu0
  %v382 = vpack.c.bf16 %v106, %v105
  %v383 = vpack.c.bf16 %v108, %v107
  %s384 = scalar_lea.vmem %s1, 256
  %v385 = vld [vmem:[%s384] sm:$0xff]
  %v386 = vld [vmem:[%s384 + $0x8] sm:$0xff]
  %v387 = vld [vmem:[%s384 + $0x10] sm:$0xff]
  %v388 = vld [vmem:[%s384 + $0x18] sm:$0xff]
  %v389 = vld [vmem:[%s384 + $0x20] sm:$0xff]
  %v390 = vld [vmem:[%s384 + $0x28] sm:$0xff]
  %v391 = vld [vmem:[%s384 + $0x30] sm:$0xff]
  %v392 = vld [vmem:[%s384 + $0x38] sm:$0xff]
  %v393 = vld [vmem:[%s384 + $0x40] sm:$0xff]
  %v394 = vld [vmem:[%s384 + $0x48] sm:$0xff]
  %v395 = vld [vmem:[%s384 + $0x50] sm:$0xff]
  %v396 = vld [vmem:[%s384 + $0x58] sm:$0xff]
  %v397 = vld [vmem:[%s384 + $0x60] sm:$0xff]
  %v398 = vld [vmem:[%s384 + $0x68] sm:$0xff]
  %v399 = vld [vmem:[%s384 + $0x70] sm:$0xff]
  %v400 = vld [vmem:[%s384 + $0x78] sm:$0xff]
  %v417 = vunpack.c.l.b16 %v385
  %v418 = vunpack.c.h.b16 %v385
  %v419 = vunpack.c.l.b16 %v386
  %v420 = vunpack.c.h.b16 %v386
  %v421 = vunpack.c.l.b16 %v387
  %v422 = vunpack.c.h.b16 %v387
  %v423 = vunpack.c.l.b16 %v388
  %v424 = vunpack.c.h.b16 %v388
  %v425 = vunpack.c.l.b16 %v389
  %v426 = vunpack.c.h.b16 %v389
  %v427 = vunpack.c.l.b16 %v390
  %v428 = vunpack.c.h.b16 %v390
  %v429 = vunpack.c.l.b16 %v391
  %v430 = vunpack.c.h.b16 %v391
  %v431 = vunpack.c.l.b16 %v392
  %v432 = vunpack.c.h.b16 %v392
  %v433 = vunpack.c.l.b16 %v393
  %v434 = vunpack.c.h.b16 %v393
  %v435 = vunpack.c.l.b16 %v394
  %v436 = vunpack.c.h.b16 %v394
  %v437 = vunpack.c.l.b16 %v395
  %v438 = vunpack.c.h.b16 %v395
  %v439 = vunpack.c.l.b16 %v396
  %v440 = vunpack.c.h.b16 %v396
  %v441 = vunpack.c.l.b16 %v397
  %v442 = vunpack.c.h.b16 %v397
  %v443 = vunpack.c.l.b16 %v398
  %v444 = vunpack.c.h.b16 %v398
  %v445 = vunpack.c.l.b16 %v399
  %v446 = vunpack.c.h.b16 %v399
  %v447 = vunpack.c.l.b16 %v400
  %v448 = vunpack.c.h.b16 %v400
  %v449 = vpack.c.b16 %v419, %v417
  %v450 = vpack.c.b16 %v420, %v418
  %v451 = vpack.c.b16 %v423, %v421
  %v452 = vpack.c.b16 %v424, %v422
  %v453 = vpack.c.b16 %v427, %v425
  %v454 = vpack.c.b16 %v428, %v426
  %v455 = vpack.c.b16 %v431, %v429
  %v456 = vpack.c.b16 %v432, %v430
  %v457 = vpack.c.b16 %v435, %v433
  %v458 = vpack.c.b16 %v436, %v434
  %v459 = vpack.c.b16 %v439, %v437
  %v460 = vpack.c.b16 %v440, %v438
  %v461 = vpack.c.b16 %v443, %v441
  %v462 = vpack.c.b16 %v444, %v442
  %v463 = vpack.c.b16 %v447, %v445
  %v464 = vpack.c.b16 %v448, %v446
  %481 = vmatpush.bf16.msra.mxu0 %v463
  %482 = vmatpush.bf16.msra.mxu0 %v461
  %483 = vmatpush.bf16.msra.mxu0 %v459
  %484 = vmatpush.bf16.msra.mxu0 %v457
  %485 = vmatpush.bf16.msra.mxu0 %v455
  %486 = vmatpush.bf16.msra.mxu0 %v453
  %487 = vmatpush.bf16.msra.mxu0 %v451
  %488 = vmatpush.bf16.msra.mxu0 %v449
  %489 = vmatmul.bf16.gmra.mxu0 %v382
  %v490 = vpop.f32.mrf.mxu0
  %v491 = vadd.f32 0.0, %v490
  %v492 = vpop.f32.mrf.mxu0
  %v493 = vadd.f32 0.0, %v492
  %494 = vmatmul.bf16.gmra.mxu0 %v383
  %v495 = vpop.f32.mrf.mxu0
  %v496 = vadd.f32 0.0, %v495
  %v497 = vpop.f32.mrf.mxu0
  %v498 = vadd.f32 0.0, %v497
  %499 = vdwg.mxu0
  %500 = vmatpush.bf16.msra.mxu0 %v464
  %501 = vmatpush.bf16.msra.mxu0 %v462
  %502 = vmatpush.bf16.msra.mxu0 %v460
  %503 = vmatpush.bf16.msra.mxu0 %v458
  %504 = vmatpush.bf16.msra.mxu0 %v456
  %505 = vmatpush.bf16.msra.mxu0 %v454
  %506 = vmatpush.bf16.msra.mxu0 %v452
  %507 = vmatpush.bf16.msra.mxu0 %v450
  %508 = vmatmul.bf16.gmra.mxu0 %v382
  %v509 = vpop.f32.mrf.mxu0
  %v510 = vadd.f32 0.0, %v509
  %v511 = vpop.f32.mrf.mxu0
  %v512 = vadd.f32 0.0, %v511
  %513 = vmatmul.bf16.gmra.mxu0 %v383
  %v514 = vpop.f32.mrf.mxu0
  %v515 = vadd.f32 0.0, %v514
  %v516 = vpop.f32.mrf.mxu0
  %v517 = vadd.f32 0.0, %v516
  %518 = vdwg.mxu0
  %v519 = vadd.f32 %v354, %v491
  %v520 = vadd.f32 %v373, %v510
  %v521 = vadd.f32 %v356, %v493
  %v522 = vadd.f32 %v375, %v512
  %v523 = vadd.f32 %v359, %v496
  %v524 = vadd.f32 %v378, %v515
  %v525 = vadd.f32 %v361, %v498
  %v526 = vadd.f32 %v380, %v517
  %v527 = vmax.f32 %v519, 0.0
  %v528 = vmax.f32 %v520, 0.0
  %v529 = vmax.f32 %v521, 0.0
  %v530 = vmax.f32 %v522, 0.0
  %v531 = vmax.f32 %v523, 0.0
  %v532 = vmax.f32 %v524, 0.0
  %v533 = vmax.f32 %v525, 0.0
  %v534 = vmax.f32 %v526, 0.0
  %v535 = vpack.c.bf16 %v529, %v527
  %v536 = vpack.c.bf16 %v530, %v528
  %v537 = vpack.c.bf16 %v533, %v531
  %v538 = vpack.c.bf16 %v534, %v532
  %v539 = vld [vmem:[%s2] sm:$0xf]
  %v540 = vld [vmem:[%s2 + $0x4] sm:$0xf]
  %v541 = vld [vmem:[%s2 + $0x8] sm:$0xf]
  %v542 = vld [vmem:[%s2 + $0xc] sm:$0xf]
  %v543 = vld [vmem:[%s2 + $0x10] sm:$0xf]
  %v544 = vld [vmem:[%s2 + $0x14] sm:$0xf]
  %v545 = vld [vmem:[%s2 + $0x18] sm:$0xf]
  %v546 = vld [vmem:[%s2 + $0x1c] sm:$0xf]
  %v547 = vld [vmem:[%s2 + $0x20] sm:$0xf]
  %v548 = vld [vmem:[%s2 + $0x24] sm:$0xf]
  %v549 = vld [vmem:[%s2 + $0x28] sm:$0xf]
  %v550 = vld [vmem:[%s2 + $0x2c] sm:$0xf]
  %v551 = vld [vmem:[%s2 + $0x30] sm:$0xf]
  %v552 = vld [vmem:[%s2 + $0x34] sm:$0xf]
  %v553 = vld [vmem:[%s2 + $0x38] sm:$0xf]
  %v554 = vld [vmem:[%s2 + $0x3c] sm:$0xf]
  %v555 = vld [vmem:[%s2 + $0x40] sm:$0xf]
  %v556 = vld [vmem:[%s2 + $0x44] sm:$0xf]
  %v557 = vld [vmem:[%s2 + $0x48] sm:$0xf]
  %v558 = vld [vmem:[%s2 + $0x4c] sm:$0xf]
  %v559 = vld [vmem:[%s2 + $0x50] sm:$0xf]
  %v560 = vld [vmem:[%s2 + $0x54] sm:$0xf]
  %v561 = vld [vmem:[%s2 + $0x58] sm:$0xf]
  %v562 = vld [vmem:[%s2 + $0x5c] sm:$0xf]
  %v563 = vld [vmem:[%s2 + $0x60] sm:$0xf]
  %v564 = vld [vmem:[%s2 + $0x64] sm:$0xf]
  %v565 = vld [vmem:[%s2 + $0x68] sm:$0xf]
  %v566 = vld [vmem:[%s2 + $0x6c] sm:$0xf]
  %v567 = vld [vmem:[%s2 + $0x70] sm:$0xf]
  %v568 = vld [vmem:[%s2 + $0x74] sm:$0xf]
  %v569 = vld [vmem:[%s2 + $0x78] sm:$0xf]
  %v570 = vld [vmem:[%s2 + $0x7c] sm:$0xf]
  %v603 = vunpack.c.l.b16 %v539
  %v604 = vunpack.c.l.b16 %v540
  %v605 = vunpack.c.l.b16 %v541
  %v606 = vunpack.c.l.b16 %v542
  %v607 = vunpack.c.l.b16 %v543
  %v608 = vunpack.c.l.b16 %v544
  %v609 = vunpack.c.l.b16 %v545
  %v610 = vunpack.c.l.b16 %v546
  %v611 = vunpack.c.l.b16 %v547
  %v612 = vunpack.c.l.b16 %v548
  %v613 = vunpack.c.l.b16 %v549
  %v614 = vunpack.c.l.b16 %v550
  %v615 = vunpack.c.l.b16 %v551
  %v616 = vunpack.c.l.b16 %v552
  %v617 = vunpack.c.l.b16 %v553
  %v618 = vunpack.c.l.b16 %v554
  %v619 = vunpack.c.l.b16 %v555
  %v620 = vunpack.c.l.b16 %v556
  %v621 = vunpack.c.l.b16 %v557
  %v622 = vunpack.c.l.b16 %v558
  %v623 = vunpack.c.l.b16 %v559
  %v624 = vunpack.c.l.b16 %v560
  %v625 = vunpack.c.l.b16 %v561
  %v626 = vunpack.c.l.b16 %v562
  %v627 = vunpack.c.l.b16 %v563
  %v628 = vunpack.c.l.b16 %v564
  %v629 = vunpack.c.l.b16 %v565
  %v630 = vunpack.c.l.b16 %v566
  %v631 = vunpack.c.l.b16 %v567
  %v632 = vunpack.c.l.b16 %v568
  %v633 = vunpack.c.l.b16 %v569
  %v634 = vunpack.c.l.b16 %v570
  %v635 = vpack.c.b16 %v604, %v603
  %v636 = vpack.c.b16 %v606, %v605
  %v637 = vpack.c.b16 %v608, %v607
  %v638 = vpack.c.b16 %v610, %v609
  %v639 = vpack.c.b16 %v612, %v611
  %v640 = vpack.c.b16 %v614, %v613
  %v641 = vpack.c.b16 %v616, %v615
  %v642 = vpack.c.b16 %v618, %v617
  %v643 = vpack.c.b16 %v620, %v619
  %v644 = vpack.c.b16 %v622, %v621
  %v645 = vpack.c.b16 %v624, %v623
  %v646 = vpack.c.b16 %v626, %v625
  %v647 = vpack.c.b16 %v628, %v627
  %v648 = vpack.c.b16 %v630, %v629
  %v649 = vpack.c.b16 %v632, %v631
  %v650 = vpack.c.b16 %v634, %v633
  %667 = vmatpush.bf16.msra.mxu0 %v642
  %668 = vmatpush.bf16.msra.mxu0 %v641
  %669 = vmatpush.bf16.msra.mxu0 %v640
  %670 = vmatpush.bf16.msra.mxu0 %v639
  %671 = vmatpush.bf16.msra.mxu0 %v638
  %672 = vmatpush.bf16.msra.mxu0 %v637
  %673 = vmatpush.bf16.msra.mxu0 %v636
  %674 = vmatpush.bf16.msra.mxu0 %v635
  %675 = vmatmul.bf16.gmra.mxu0 %v535
  %v676 = vpop.f32.mrf.mxu0
  %v677 = vadd.f32 0.0, %v676
  %v678 = vpop.f32.mrf.mxu0
  %v679 = vadd.f32 0.0, %v678
  %680 = vmatmul.bf16.gmra.mxu0 %v537
  %v681 = vpop.f32.mrf.mxu0
  %v682 = vadd.f32 0.0, %v681
  %v683 = vpop.f32.mrf.mxu0
  %v684 = vadd.f32 0.0, %v683
  %685 = vdwg.mxu0
  %686 = vmatpush.bf16.msra.mxu0 %v650
  %687 = vmatpush.bf16.msra.mxu0 %v649
  %688 = vmatpush.bf16.msra.mxu0 %v648
  %689 = vmatpush.bf16.msra.mxu0 %v647
  %690 = vmatpush.bf16.msra.mxu0 %v646
  %691 = vmatpush.bf16.msra.mxu0 %v645
  %692 = vmatpush.bf16.msra.mxu0 %v644
  %693 = vmatpush.bf16.msra.mxu0 %v643
  %694 = vmatmul.bf16.gmra.mxu0 %v536
  %v695 = vpop.f32.mrf.mxu0
  %v696 = vadd.f32 %v677, %v695
  %v697 = vpop.f32.mrf.mxu0
  %v698 = vadd.f32 %v679, %v697
  %699 = vmatmul.bf16.gmra.mxu0 %v538
  %v700 = vpop.f32.mrf.mxu0
  %v701 = vadd.f32 %v682, %v700
  %v702 = vpop.f32.mrf.mxu0
  %v703 = vadd.f32 %v684, %v702
  %704 = vdwg.mxu0
  %v705 = vadd.f32 %v14, %v696
  %v706 = vadd.f32 %v15, %v698
  %v707 = vadd.f32 %v16, %v701
  %v708 = vadd.f32 %v17, %v703
  %v709 = vmax.f32 %v705, 0.0
  %v710 = vmax.f32 %v706, 0.0
  %v711 = vmax.f32 %v707, 0.0
  %v712 = vmax.f32 %v708, 0.0
  %v713 = vmax.f32 %v709, 0.0
  %v714 = vmax.f32 %v710, 0.0
  %v715 = vmax.f32 %v711, 0.0
  %v716 = vmax.f32 %v712, 0.0
  %v717 = vrot.slane %v713, 7
  %v718 = vrot.slane %v714, 7
  %v719 = vrot.slane %v715, 7
  %v720 = vrot.slane %v716, 7
  %v721 = vsel %vm87, %v719, %v720
  %v722 = vsel %vm87, %v718, %v719
  %v723 = vsel %vm87, %v717, %v718
  %v724 = vsel %vm87, %v720, %v717
  %v725 = vsel %vm71, 0.0, %v724
  %v726 = vsel %vm72, 0.0, %v723
  %v727 = vsel %vm73, 0.0, %v722
  %v728 = vsel %vm74, 0.0, %v721
  %v729 = vrot.slane %v713, 1
  %v730 = vrot.slane %v714, 1
  %v731 = vrot.slane %v715, 1
  %v732 = vrot.slane %v716, 1
  %v733 = vsel %vm100, %v731, %v732
  %v734 = vsel %vm100, %v730, %v731
  %v735 = vsel %vm100, %v729, %v730
  %v736 = vsel %vm100, %v732, %v729
  %v737 = vsel %vm75, 0.0, %v735
  %v738 = vsel %vm76, 0.0, %v734
  %v739 = vsel %vm77, 0.0, %v733
  %v740 = vsel %vm78, 0.0, %v736
  %v741 = vpack.c.bf16 %v726, %v725
  %v742 = vpack.c.bf16 %v728, %v727
  %s743 = scalar_lea.vmem %s1, 384
  %v744 = vld [vmem:[%s743] sm:$0xff]
  %v745 = vld [vmem:[%s743 + $0x8] sm:$0xff]
  %v746 = vld [vmem:[%s743 + $0x10] sm:$0xff]
  %v747 = vld [vmem:[%s743 + $0x18] sm:$0xff]
  %v748 = vld [vmem:[%s743 + $0x20] sm:$0xff]
  %v749 = vld [vmem:[%s743 + $0x28] sm:$0xff]
  %v750 = vld [vmem:[%s743 + $0x30] sm:$0xff]
  %v751 = vld [vmem:[%s743 + $0x38] sm:$0xff]
  %v752 = vld [vmem:[%s743 + $0x40] sm:$0xff]
  %v753 = vld [vmem:[%s743 + $0x48] sm:$0xff]
  %v754 = vld [vmem:[%s743 + $0x50] sm:$0xff]
  %v755 = vld [vmem:[%s743 + $0x58] sm:$0xff]
  %v756 = vld [vmem:[%s743 + $0x60] sm:$0xff]
  %v757 = vld [vmem:[%s743 + $0x68] sm:$0xff]
  %v758 = vld [vmem:[%s743 + $0x70] sm:$0xff]
  %v759 = vld [vmem:[%s743 + $0x78] sm:$0xff]
  %v760 = vpack.c.bf16 %v714, %v713
  %v761 = vpack.c.bf16 %v716, %v715
  %s762 = scalar_lea.vmem %s1, 512
  %v763 = vld [vmem:[%s762] sm:$0xff]
  %v764 = vld [vmem:[%s762 + $0x8] sm:$0xff]
  %v765 = vld [vmem:[%s762 + $0x10] sm:$0xff]
  %v766 = vld [vmem:[%s762 + $0x18] sm:$0xff]
  %v767 = vld [vmem:[%s762 + $0x20] sm:$0xff]
  %v768 = vld [vmem:[%s762 + $0x28] sm:$0xff]
  %v769 = vld [vmem:[%s762 + $0x30] sm:$0xff]
  %v770 = vld [vmem:[%s762 + $0x38] sm:$0xff]
  %v771 = vld [vmem:[%s762 + $0x40] sm:$0xff]
  %v772 = vld [vmem:[%s762 + $0x48] sm:$0xff]
  %v773 = vld [vmem:[%s762 + $0x50] sm:$0xff]
  %v774 = vld [vmem:[%s762 + $0x58] sm:$0xff]
  %v775 = vld [vmem:[%s762 + $0x60] sm:$0xff]
  %v776 = vld [vmem:[%s762 + $0x68] sm:$0xff]
  %v777 = vld [vmem:[%s762 + $0x70] sm:$0xff]
  %v778 = vld [vmem:[%s762 + $0x78] sm:$0xff]
  %v795 = vunpack.c.l.b16 %v763
  %v796 = vunpack.c.h.b16 %v763
  %v797 = vunpack.c.l.b16 %v764
  %v798 = vunpack.c.h.b16 %v764
  %v799 = vunpack.c.l.b16 %v765
  %v800 = vunpack.c.h.b16 %v765
  %v801 = vunpack.c.l.b16 %v766
  %v802 = vunpack.c.h.b16 %v766
  %v803 = vunpack.c.l.b16 %v767
  %v804 = vunpack.c.h.b16 %v767
  %v805 = vunpack.c.l.b16 %v768
  %v806 = vunpack.c.h.b16 %v768
  %v807 = vunpack.c.l.b16 %v769
  %v808 = vunpack.c.h.b16 %v769
  %v809 = vunpack.c.l.b16 %v770
  %v810 = vunpack.c.h.b16 %v770
  %v811 = vunpack.c.l.b16 %v771
  %v812 = vunpack.c.h.b16 %v771
  %v813 = vunpack.c.l.b16 %v772
  %v814 = vunpack.c.h.b16 %v772
  %v815 = vunpack.c.l.b16 %v773
  %v816 = vunpack.c.h.b16 %v773
  %v817 = vunpack.c.l.b16 %v774
  %v818 = vunpack.c.h.b16 %v774
  %v819 = vunpack.c.l.b16 %v775
  %v820 = vunpack.c.h.b16 %v775
  %v821 = vunpack.c.l.b16 %v776
  %v822 = vunpack.c.h.b16 %v776
  %v823 = vunpack.c.l.b16 %v777
  %v824 = vunpack.c.h.b16 %v777
  %v825 = vunpack.c.l.b16 %v778
  %v826 = vunpack.c.h.b16 %v778
  %v827 = vpack.c.b16 %v797, %v795
  %v828 = vpack.c.b16 %v798, %v796
  %v829 = vpack.c.b16 %v801, %v799
  %v830 = vpack.c.b16 %v802, %v800
  %v831 = vpack.c.b16 %v805, %v803
  %v832 = vpack.c.b16 %v806, %v804
  %v833 = vpack.c.b16 %v809, %v807
  %v834 = vpack.c.b16 %v810, %v808
  %v835 = vpack.c.b16 %v813, %v811
  %v836 = vpack.c.b16 %v814, %v812
  %v837 = vpack.c.b16 %v817, %v815
  %v838 = vpack.c.b16 %v818, %v816
  %v839 = vpack.c.b16 %v821, %v819
  %v840 = vpack.c.b16 %v822, %v820
  %v841 = vpack.c.b16 %v825, %v823
  %v842 = vpack.c.b16 %v826, %v824
  %859 = vmatpush.bf16.msra.mxu0 %v841
  %860 = vmatpush.bf16.msra.mxu0 %v839
  %861 = vmatpush.bf16.msra.mxu0 %v837
  %862 = vmatpush.bf16.msra.mxu0 %v835
  %863 = vmatpush.bf16.msra.mxu0 %v833
  %864 = vmatpush.bf16.msra.mxu0 %v831
  %865 = vmatpush.bf16.msra.mxu0 %v829
  %866 = vmatpush.bf16.msra.mxu0 %v827
  %867 = vmatmul.bf16.gmra.mxu0 %v760
  %v868 = vpop.f32.mrf.mxu0
  %v869 = vadd.f32 0.0, %v868
  %v870 = vpop.f32.mrf.mxu0
  %v871 = vadd.f32 0.0, %v870
  %872 = vmatmul.bf16.gmra.mxu0 %v761
  %v873 = vpop.f32.mrf.mxu0
  %v874 = vadd.f32 0.0, %v873
  %v875 = vpop.f32.mrf.mxu0
  %v876 = vadd.f32 0.0, %v875
  %877 = vdwg.mxu0
  %878 = vmatpush.bf16.msra.mxu0 %v842
  %879 = vmatpush.bf16.msra.mxu0 %v840
  %880 = vmatpush.bf16.msra.mxu0 %v838
  %881 = vmatpush.bf16.msra.mxu0 %v836
  %882 = vmatpush.bf16.msra.mxu0 %v834
  %883 = vmatpush.bf16.msra.mxu0 %v832
  %884 = vmatpush.bf16.msra.mxu0 %v830
  %885 = vmatpush.bf16.msra.mxu0 %v828
  %886 = vmatmul.bf16.gmra.mxu0 %v760
  %v887 = vpop.f32.mrf.mxu0
  %v888 = vadd.f32 0.0, %v887
  %v889 = vpop.f32.mrf.mxu0
  %v890 = vadd.f32 0.0, %v889
  %891 = vmatmul.bf16.gmra.mxu0 %v761
  %v892 = vpop.f32.mrf.mxu0
  %v893 = vadd.f32 0.0, %v892
  %v894 = vpop.f32.mrf.mxu0
  %v895 = vadd.f32 0.0, %v894
  %896 = vdwg.mxu0
  %v913 = vunpack.c.l.b16 %v744
  %v914 = vunpack.c.h.b16 %v744
  %v915 = vunpack.c.l.b16 %v745
  %v916 = vunpack.c.h.b16 %v745
  %v917 = vunpack.c.l.b16 %v746
  %v918 = vunpack.c.h.b16 %v746
  %v919 = vunpack.c.l.b16 %v747
  %v920 = vunpack.c.h.b16 %v747
  %v921 = vunpack.c.l.b16 %v748
  %v922 = vunpack.c.h.b16 %v748
  %v923 = vunpack.c.l.b16 %v749
  %v924 = vunpack.c.h.b16 %v749
  %v925 = vunpack.c.l.b16 %v750
  %v926 = vunpack.c.h.b16 %v750
  %v927 = vunpack.c.l.b16 %v751
  %v928 = vunpack.c.h.b16 %v751
  %v929 = vunpack.c.l.b16 %v752
  %v930 = vunpack.c.h.b16 %v752
  %v931 = vunpack.c.l.b16 %v753
  %v932 = vunpack.c.h.b16 %v753
  %v933 = vunpack.c.l.b16 %v754
  %v934 = vunpack.c.h.b16 %v754
  %v935 = vunpack.c.l.b16 %v755
  %v936 = vunpack.c.h.b16 %v755
  %v937 = vunpack.c.l.b16 %v756
  %v938 = vunpack.c.h.b16 %v756
  %v939 = vunpack.c.l.b16 %v757
  %v940 = vunpack.c.h.b16 %v757
  %v941 = vunpack.c.l.b16 %v758
  %v942 = vunpack.c.h.b16 %v758
  %v943 = vunpack.c.l.b16 %v759
  %v944 = vunpack.c.h.b16 %v759
  %v945 = vpack.c.b16 %v915, %v913
  %v946 = vpack.c.b16 %v916, %v914
  %v947 = vpack.c.b16 %v919, %v917
  %v948 = vpack.c.b16 %v920, %v918
  %v949 = vpack.c.b16 %v923, %v921
  %v950 = vpack.c.b16 %v924, %v922
  %v951 = vpack.c.b16 %v927, %v925
  %v952 = vpack.c.b16 %v928, %v926
  %v953 = vpack.c.b16 %v931, %v929
  %v954 = vpack.c.b16 %v932, %v930
  %v955 = vpack.c.b16 %v935, %v933
  %v956 = vpack.c.b16 %v936, %v934
  %v957 = vpack.c.b16 %v939, %v937
  %v958 = vpack.c.b16 %v940, %v938
  %v959 = vpack.c.b16 %v943, %v941
  %v960 = vpack.c.b16 %v944, %v942
  %977 = vmatpush.bf16.msra.mxu0 %v959
  %978 = vmatpush.bf16.msra.mxu0 %v957
  %979 = vmatpush.bf16.msra.mxu0 %v955
  %980 = vmatpush.bf16.msra.mxu0 %v953
  %981 = vmatpush.bf16.msra.mxu0 %v951
  %982 = vmatpush.bf16.msra.mxu0 %v949
  %983 = vmatpush.bf16.msra.mxu0 %v947
  %984 = vmatpush.bf16.msra.mxu0 %v945
  %985 = vmatmul.bf16.gmra.mxu0 %v741
  %v986 = vpop.f32.mrf.mxu0
  %v987 = vadd.f32 %v869, %v986
  %v988 = vpop.f32.mrf.mxu0
  %v989 = vadd.f32 %v871, %v988
  %990 = vmatmul.bf16.gmra.mxu0 %v742
  %v991 = vpop.f32.mrf.mxu0
  %v992 = vadd.f32 %v874, %v991
  %v993 = vpop.f32.mrf.mxu0
  %v994 = vadd.f32 %v876, %v993
  %995 = vdwg.mxu0
  %996 = vmatpush.bf16.msra.mxu0 %v960
  %997 = vmatpush.bf16.msra.mxu0 %v958
  %998 = vmatpush.bf16.msra.mxu0 %v956
  %999 = vmatpush.bf16.msra.mxu0 %v954
  %1000 = vmatpush.bf16.msra.mxu0 %v952
  %1001 = vmatpush.bf16.msra.mxu0 %v950
  %1002 = vmatpush.bf16.msra.mxu0 %v948
  %1003 = vmatpush.bf16.msra.mxu0 %v946
  %1004 = vmatmul.bf16.gmra.mxu0 %v741
  %v1005 = vpop.f32.mrf.mxu0
  %v1006 = vadd.f32 %v888, %v1005
  %v1007 = vpop.f32.mrf.mxu0
  %v1008 = vadd.f32 %v890, %v1007
  %1009 = vmatmul.bf16.gmra.mxu0 %v742
  %v1010 = vpop.f32.mrf.mxu0
  %v1011 = vadd.f32 %v893, %v1010
  %v1012 = vpop.f32.mrf.mxu0
  %v1013 = vadd.f32 %v895, %v1012
  %1014 = vdwg.mxu0
  %v1015 = vpack.c.bf16 %v738, %v737
  %v1016 = vpack.c.bf16 %v740, %v739
  %s1017 = scalar_lea.vmem %s1, 640
  %v1018 = vld [vmem:[%s1017] sm:$0xff]
  %v1019 = vld [vmem:[%s1017 + $0x8] sm:$0xff]
  %v1020 = vld [vmem:[%s1017 + $0x10] sm:$0xff]
  %v1021 = vld [vmem:[%s1017 + $0x18] sm:$0xff]
  %v1022 = vld [vmem:[%s1017 + $0x20] sm:$0xff]
  %v1023 = vld [vmem:[%s1017 + $0x28] sm:$0xff]
  %v1024 = vld [vmem:[%s1017 + $0x30] sm:$0xff]
  %v1025 = vld [vmem:[%s1017 + $0x38] sm:$0xff]
  %v1026 = vld [vmem:[%s1017 + $0x40] sm:$0xff]
  %v1027 = vld [vmem:[%s1017 + $0x48] sm:$0xff]
  %v1028 = vld [vmem:[%s1017 + $0x50] sm:$0xff]
  %v1029 = vld [vmem:[%s1017 + $0x58] sm:$0xff]
  %v1030 = vld [vmem:[%s1017 + $0x60] sm:$0xff]
  %v1031 = vld [vmem:[%s1017 + $0x68] sm:$0xff]
  %v1032 = vld [vmem:[%s1017 + $0x70] sm:$0xff]
  %v1033 = vld [vmem:[%s1017 + $0x78] sm:$0xff]
  %v1050 = vunpack.c.l.b16 %v1018
  %v1051 = vunpack.c.h.b16 %v1018
  %v1052 = vunpack.c.l.b16 %v1019
  %v1053 = vunpack.c.h.b16 %v1019
  %v1054 = vunpack.c.l.b16 %v1020
  %v1055 = vunpack.c.h.b16 %v1020
  %v1056 = vunpack.c.l.b16 %v1021
  %v1057 = vunpack.c.h.b16 %v1021
  %v1058 = vunpack.c.l.b16 %v1022
  %v1059 = vunpack.c.h.b16 %v1022
  %v1060 = vunpack.c.l.b16 %v1023
  %v1061 = vunpack.c.h.b16 %v1023
  %v1062 = vunpack.c.l.b16 %v1024
  %v1063 = vunpack.c.h.b16 %v1024
  %v1064 = vunpack.c.l.b16 %v1025
  %v1065 = vunpack.c.h.b16 %v1025
  %v1066 = vunpack.c.l.b16 %v1026
  %v1067 = vunpack.c.h.b16 %v1026
  %v1068 = vunpack.c.l.b16 %v1027
  %v1069 = vunpack.c.h.b16 %v1027
  %v1070 = vunpack.c.l.b16 %v1028
  %v1071 = vunpack.c.h.b16 %v1028
  %v1072 = vunpack.c.l.b16 %v1029
  %v1073 = vunpack.c.h.b16 %v1029
  %v1074 = vunpack.c.l.b16 %v1030
  %v1075 = vunpack.c.h.b16 %v1030
  %v1076 = vunpack.c.l.b16 %v1031
  %v1077 = vunpack.c.h.b16 %v1031
  %v1078 = vunpack.c.l.b16 %v1032
  %v1079 = vunpack.c.h.b16 %v1032
  %v1080 = vunpack.c.l.b16 %v1033
  %v1081 = vunpack.c.h.b16 %v1033
  %v1082 = vpack.c.b16 %v1052, %v1050
  %v1083 = vpack.c.b16 %v1053, %v1051
  %v1084 = vpack.c.b16 %v1056, %v1054
  %v1085 = vpack.c.b16 %v1057, %v1055
  %v1086 = vpack.c.b16 %v1060, %v1058
  %v1087 = vpack.c.b16 %v1061, %v1059
  %v1088 = vpack.c.b16 %v1064, %v1062
  %v1089 = vpack.c.b16 %v1065, %v1063
  %v1090 = vpack.c.b16 %v1068, %v1066
  %v1091 = vpack.c.b16 %v1069, %v1067
  %v1092 = vpack.c.b16 %v1072, %v1070
  %v1093 = vpack.c.b16 %v1073, %v1071
  %v1094 = vpack.c.b16 %v1076, %v1074
  %v1095 = vpack.c.b16 %v1077, %v1075
  %v1096 = vpack.c.b16 %v1080, %v1078
  %v1097 = vpack.c.b16 %v1081, %v1079
  %1114 = vmatpush.bf16.msra.mxu0 %v1096
  %1115 = vmatpush.bf16.msra.mxu0 %v1094
  %1116 = vmatpush.bf16.msra.mxu0 %v1092
  %1117 = vmatpush.bf16.msra.mxu0 %v1090
  %1118 = vmatpush.bf16.msra.mxu0 %v1088
  %1119 = vmatpush.bf16.msra.mxu0 %v1086
  %1120 = vmatpush.bf16.msra.mxu0 %v1084
  %1121 = vmatpush.bf16.msra.mxu0 %v1082
  %1122 = vmatmul.bf16.gmra.mxu0 %v1015
  %v1123 = vpop.f32.mrf.mxu0
  %v1124 = vadd.f32 0.0, %v1123
  %v1125 = vpop.f32.mrf.mxu0
  %v1126 = vadd.f32 0.0, %v1125
  %1127 = vmatmul.bf16.gmra.mxu0 %v1016
  %v1128 = vpop.f32.mrf.mxu0
  %v1129 = vadd.f32 0.0, %v1128
  %v1130 = vpop.f32.mrf.mxu0
  %v1131 = vadd.f32 0.0, %v1130
  %1132 = vdwg.mxu0
  %1133 = vmatpush.bf16.msra.mxu0 %v1097
  %1134 = vmatpush.bf16.msra.mxu0 %v1095
  %1135 = vmatpush.bf16.msra.mxu0 %v1093
  %1136 = vmatpush.bf16.msra.mxu0 %v1091
  %1137 = vmatpush.bf16.msra.mxu0 %v1089
  %1138 = vmatpush.bf16.msra.mxu0 %v1087
  %1139 = vmatpush.bf16.msra.mxu0 %v1085
  %1140 = vmatpush.bf16.msra.mxu0 %v1083
  %1141 = vmatmul.bf16.gmra.mxu0 %v1015
  %v1142 = vpop.f32.mrf.mxu0
  %v1143 = vadd.f32 0.0, %v1142
  %v1144 = vpop.f32.mrf.mxu0
  %v1145 = vadd.f32 0.0, %v1144
  %1146 = vmatmul.bf16.gmra.mxu0 %v1016
  %v1147 = vpop.f32.mrf.mxu0
  %v1148 = vadd.f32 0.0, %v1147
  %v1149 = vpop.f32.mrf.mxu0
  %v1150 = vadd.f32 0.0, %v1149
  %1151 = vdwg.mxu0
  %v1152 = vadd.f32 %v987, %v1124
  %v1153 = vadd.f32 %v1006, %v1143
  %v1154 = vadd.f32 %v989, %v1126
  %v1155 = vadd.f32 %v1008, %v1145
  %v1156 = vadd.f32 %v992, %v1129
  %v1157 = vadd.f32 %v1011, %v1148
  %v1158 = vadd.f32 %v994, %v1131
  %v1159 = vadd.f32 %v1013, %v1150
  %v1160 = vmax.f32 %v1152, 0.0
  %v1161 = vmax.f32 %v1153, 0.0
  %v1162 = vmax.f32 %v1154, 0.0
  %v1163 = vmax.f32 %v1155, 0.0
  %v1164 = vmax.f32 %v1156, 0.0
  %v1165 = vmax.f32 %v1157, 0.0
  %v1166 = vmax.f32 %v1158, 0.0
  %v1167 = vmax.f32 %v1159, 0.0
  %v1168 = vpack.c.bf16 %v1162, %v1160
  %v1169 = vpack.c.bf16 %v1163, %v1161
  %v1170 = vpack.c.bf16 %v1166, %v1164
  %v1171 = vpack.c.bf16 %v1167, %v1165
  %s1172 = scalar_lea.vmem %s2, 128
  %v1173 = vld [vmem:[%s1172] sm:$0xf]
  %v1174 = vld [vmem:[%s1172 + $0x4] sm:$0xf]
  %v1175 = vld [vmem:[%s1172 + $0x8] sm:$0xf]
  %v1176 = vld [vmem:[%s1172 + $0xc] sm:$0xf]
  %v1177 = vld [vmem:[%s1172 + $0x10] sm:$0xf]
  %v1178 = vld [vmem:[%s1172 + $0x14] sm:$0xf]
  %v1179 = vld [vmem:[%s1172 + $0x18] sm:$0xf]
  %v1180 = vld [vmem:[%s1172 + $0x1c] sm:$0xf]
  %v1181 = vld [vmem:[%s1172 + $0x20] sm:$0xf]
  %v1182 = vld [vmem:[%s1172 + $0x24] sm:$0xf]
  %v1183 = vld [vmem:[%s1172 + $0x28] sm:$0xf]
  %v1184 = vld [vmem:[%s1172 + $0x2c] sm:$0xf]
  %v1185 = vld [vmem:[%s1172 + $0x30] sm:$0xf]
  %v1186 = vld [vmem:[%s1172 + $0x34] sm:$0xf]
  %v1187 = vld [vmem:[%s1172 + $0x38] sm:$0xf]
  %v1188 = vld [vmem:[%s1172 + $0x3c] sm:$0xf]
  %v1189 = vld [vmem:[%s1172 + $0x40] sm:$0xf]
  %v1190 = vld [vmem:[%s1172 + $0x44] sm:$0xf]
  %v1191 = vld [vmem:[%s1172 + $0x48] sm:$0xf]
  %v1192 = vld [vmem:[%s1172 + $0x4c] sm:$0xf]
  %v1193 = vld [vmem:[%s1172 + $0x50] sm:$0xf]
  %v1194 = vld [vmem:[%s1172 + $0x54] sm:$0xf]
  %v1195 = vld [vmem:[%s1172 + $0x58] sm:$0xf]
  %v1196 = vld [vmem:[%s1172 + $0x5c] sm:$0xf]
  %v1197 = vld [vmem:[%s1172 + $0x60] sm:$0xf]
  %v1198 = vld [vmem:[%s1172 + $0x64] sm:$0xf]
  %v1199 = vld [vmem:[%s1172 + $0x68] sm:$0xf]
  %v1200 = vld [vmem:[%s1172 + $0x6c] sm:$0xf]
  %v1201 = vld [vmem:[%s1172 + $0x70] sm:$0xf]
  %v1202 = vld [vmem:[%s1172 + $0x74] sm:$0xf]
  %v1203 = vld [vmem:[%s1172 + $0x78] sm:$0xf]
  %v1204 = vld [vmem:[%s1172 + $0x7c] sm:$0xf]
  %v1237 = vunpack.c.l.b16 %v1173
  %v1238 = vunpack.c.l.b16 %v1174
  %v1239 = vunpack.c.l.b16 %v1175
  %v1240 = vunpack.c.l.b16 %v1176
  %v1241 = vunpack.c.l.b16 %v1177
  %v1242 = vunpack.c.l.b16 %v1178
  %v1243 = vunpack.c.l.b16 %v1179
  %v1244 = vunpack.c.l.b16 %v1180
  %v1245 = vunpack.c.l.b16 %v1181
  %v1246 = vunpack.c.l.b16 %v1182
  %v1247 = vunpack.c.l.b16 %v1183
  %v1248 = vunpack.c.l.b16 %v1184
  %v1249 = vunpack.c.l.b16 %v1185
  %v1250 = vunpack.c.l.b16 %v1186
  %v1251 = vunpack.c.l.b16 %v1187
  %v1252 = vunpack.c.l.b16 %v1188
  %v1253 = vunpack.c.l.b16 %v1189
  %v1254 = vunpack.c.l.b16 %v1190
  %v1255 = vunpack.c.l.b16 %v1191
  %v1256 = vunpack.c.l.b16 %v1192
  %v1257 = vunpack.c.l.b16 %v1193
  %v1258 = vunpack.c.l.b16 %v1194
  %v1259 = vunpack.c.l.b16 %v1195
  %v1260 = vunpack.c.l.b16 %v1196
  %v1261 = vunpack.c.l.b16 %v1197
  %v1262 = vunpack.c.l.b16 %v1198
  %v1263 = vunpack.c.l.b16 %v1199
  %v1264 = vunpack.c.l.b16 %v1200
  %v1265 = vunpack.c.l.b16 %v1201
  %v1266 = vunpack.c.l.b16 %v1202
  %v1267 = vunpack.c.l.b16 %v1203
  %v1268 = vunpack.c.l.b16 %v1204
  %v1269 = vpack.c.b16 %v1238, %v1237
  %v1270 = vpack.c.b16 %v1240, %v1239
  %v1271 = vpack.c.b16 %v1242, %v1241
  %v1272 = vpack.c.b16 %v1244, %v1243
  %v1273 = vpack.c.b16 %v1246, %v1245
  %v1274 = vpack.c.b16 %v1248, %v1247
  %v1275 = vpack.c.b16 %v1250, %v1249
  %v1276 = vpack.c.b16 %v1252, %v1251
  %v1277 = vpack.c.b16 %v1254, %v1253
  %v1278 = vpack.c.b16 %v1256, %v1255
  %v1279 = vpack.c.b16 %v1258, %v1257
  %v1280 = vpack.c.b16 %v1260, %v1259
  %v1281 = vpack.c.b16 %v1262, %v1261
  %v1282 = vpack.c.b16 %v1264, %v1263
  %v1283 = vpack.c.b16 %v1266, %v1265
  %v1284 = vpack.c.b16 %v1268, %v1267
  %1301 = vmatpush.bf16.msra.mxu0 %v1276
  %1302 = vmatpush.bf16.msra.mxu0 %v1275
  %1303 = vmatpush.bf16.msra.mxu0 %v1274
  %1304 = vmatpush.bf16.msra.mxu0 %v1273
  %1305 = vmatpush.bf16.msra.mxu0 %v1272
  %1306 = vmatpush.bf16.msra.mxu0 %v1271
  %1307 = vmatpush.bf16.msra.mxu0 %v1270
  %1308 = vmatpush.bf16.msra.mxu0 %v1269
  %1309 = vmatmul.bf16.gmra.mxu0 %v1168
  %v1310 = vpop.f32.mrf.mxu0
  %v1311 = vadd.f32 0.0, %v1310
  %v1312 = vpop.f32.mrf.mxu0
  %v1313 = vadd.f32 0.0, %v1312
  %1314 = vmatmul.bf16.gmra.mxu0 %v1170
  %v1315 = vpop.f32.mrf.mxu0
  %v1316 = vadd.f32 0.0, %v1315
  %v1317 = vpop.f32.mrf.mxu0
  %v1318 = vadd.f32 0.0, %v1317
  %1319 = vdwg.mxu0
  %1320 = vmatpush.bf16.msra.mxu0 %v1284
  %1321 = vmatpush.bf16.msra.mxu0 %v1283
  %1322 = vmatpush.bf16.msra.mxu0 %v1282
  %1323 = vmatpush.bf16.msra.mxu0 %v1281
  %1324 = vmatpush.bf16.msra.mxu0 %v1280
  %1325 = vmatpush.bf16.msra.mxu0 %v1279
  %1326 = vmatpush.bf16.msra.mxu0 %v1278
  %1327 = vmatpush.bf16.msra.mxu0 %v1277
  %1328 = vmatmul.bf16.gmra.mxu0 %v1169
  %v1329 = vpop.f32.mrf.mxu0
  %v1330 = vadd.f32 %v1311, %v1329
  %v1331 = vpop.f32.mrf.mxu0
  %v1332 = vadd.f32 %v1313, %v1331
  %1333 = vmatmul.bf16.gmra.mxu0 %v1171
  %v1334 = vpop.f32.mrf.mxu0
  %v1335 = vadd.f32 %v1316, %v1334
  %v1336 = vpop.f32.mrf.mxu0
  %v1337 = vadd.f32 %v1318, %v1336
  %1338 = vdwg.mxu0
  %v1339 = vadd.f32 %v709, %v1330
  %v1340 = vadd.f32 %v710, %v1332
  %v1341 = vadd.f32 %v711, %v1335
  %v1342 = vadd.f32 %v712, %v1337
  %v1343 = vmax.f32 %v1339, 0.0
  %v1344 = vmax.f32 %v1340, 0.0
  %v1345 = vmax.f32 %v1341, 0.0
  %v1346 = vmax.f32 %v1342, 0.0
  %1347 = vst [vmem:[%s3] sm:$0xff] %v1343
  %1348 = vst [vmem:[%s3 + $0x8] sm:$0xff] %v1344
  %1349 = vst [vmem:[%s3 + $0x10] sm:$0xff] %v1345
  %1350 = vst [vmem:[%s3 + $0x18] sm:$0xff] %v1346
  // Predicated region
  $region14: #{residual_stack.1} parent=0 // pred_check
    _
  $region15: #{residual_stack.1} parent=0 // pred_check_branch
    %1352 = sbr.rel (0) target = $region17
  $region16: #{residual_stack.1} parent=0 // pred_region
    _
  $region17: #{residual_stack.1} parent=0 // pred_fallthru
    _
  // Predicated region
  $region18: #{residual_stack.1} parent=0 // pred_check
    _
  $region19: #{residual_stack.1} parent=0 // pred_check_branch
    %1354 = sbr.rel (0) target = $region21
  $region20: #{residual_stack.1} parent=0 // pred_region
    _
  $region21: #{residual_stack.1} parent=0 // pred_fallthru
    _

</llo_original>
